<compile_context>
chip_gen: v7x
topology: tpu7x:2x2x1
jax: 0.10.0
libtpu: 0.0.40
codegen_flags: <defaults>
</compile_context>

<pallas_src>
import functools

import jax
import jax.numpy as jnp
from jax.experimental import pallas as pl
from jax.experimental.pallas import tpu as pltpu


def _rsum(a):
    """(R, W) -> (1, 1): reduce lanes first, then sublanes."""
    return jnp.sum(jnp.sum(a, axis=1, keepdims=True), axis=0, keepdims=True)


def _dc_ce_kernel(x_ref, y_ref, stats_ref, e_ref, *, n_classes, h_total,
                  tile_h, ragged, approx_recip):
    # x_ref     : (1, C, Th, W) logits, native dtype
    # y_ref     : (1, 1, Th, W) labels (int8 / int32)
    # stats_ref : (1, C, 4) f32 accumulator, resident across the tile axis
    #             cols: [tp, sum(p), onehot_count, ce (channel 0 only)]
    # e_ref     : (C, Th, W) f32 scratch holding exp(x - m)
    t = pl.program_id(1)

    @pl.when(t == 0)
    def _init():
        stats_ref[...] = jnp.zeros_like(stats_ref)

    labels = y_ref[0, 0].astype(jnp.int32)                      # (Th, W)

    row_ok = None
    if ragged:
        # The last tile reads past H; those rows hold garbage.  Kill their
        # labels so they contribute nothing to tp / onehot_count / ce.
        row = jax.lax.broadcasted_iota(jnp.int32, (tile_h, 1), 0)
        row_ok = (row + t * tile_h) < h_total                   # (Th, 1) bool
        labels = jnp.where(row_ok, labels, -1)

    # ---- pass 1: per-pixel max over channels (native dtype, cast once) ----
    m = x_ref[0, 0]
    for c in range(1, n_classes):
        m = jnp.maximum(m, x_ref[0, c])
    m = m.astype(jnp.float32)                                   # (Th, W)

    # ---- pass 2: exp / sum-exp / label-channel logit / one-hot counts ----
    s = None
    d_sel = jnp.zeros_like(m)            # (x[label] - m) per pixel
    for c in range(n_classes):
        xc = x_ref[0, c].astype(jnp.float32)
        d = xc - m
        e = jnp.exp(d)
        e_ref[c] = e
        s = e if s is None else s + e
        mask_c = labels == c
        d_sel = d_sel + jnp.where(mask_c, d, 0.0)
        oh_c = _rsum(jnp.where(mask_c, 1.0, 0.0))
        stats_ref[0, c:c + 1, 2:3] += oh_c

    if approx_recip:
        inv_s = pl.reciprocal(s, approx=True)    # EUP slot, ~2^-12 rel error
    else:
        inv_s = 1.0 / s
    ls = jnp.log(s)

    # Cross entropy: -log_softmax[label] = log(s) - (x[label] - m).
    # Out-of-range / negative labels contribute nothing (matches prior behavior).
    in_range = jnp.logical_and(labels >= 0, labels < n_classes)
    ce = _rsum(jnp.where(in_range, ls - d_sel, 0.0))
    stats_ref[0, 0:1, 3:4] += ce

    # ---- pass 3: softmax probs -> tp / sum(p) per channel ----
    for c in range(n_classes):
        p = e_ref[c] * inv_s
        mask_c = labels == c
        tp_c = _rsum(jnp.where(mask_c, p, 0.0))
        row_sums = jnp.sum(p, axis=1, keepdims=True)            # (Th, 1)
        if ragged:
            row_sums = jnp.where(row_ok, row_sums, 0.0)
        psum_c = jnp.sum(row_sums, axis=0, keepdims=True)       # (1, 1)
        stats_ref[0, c:c + 1, 0:1] += tp_c
        stats_ref[0, c:c + 1, 1:2] += psum_c


def dc_and_ce_loss(net_output, target, *, weight_ce=1.0, weight_dice=1.0,
                   smooth=1.0, target_tile_bytes=4 << 20,
                   approx_reciprocal=True):
    """Equivalent of DC_and_CE_loss(soft_dice_kwargs={}, ce_kwargs={}) forward.

    net_output: (B, C, H, W) logits (any float dtype; consumed in-place, no
                HBM copy / upcast).
    target:     (B, 1, H, W) or (B, H, W) label map (float or int).
    target_tile_bytes: ~logit bytes per grid step (default 4 MiB; keep <= 8 MiB
                on v7x, whose scoped VMEM default is 32 MiB of 64 MiB physical).
    """
    B, C, H, W = net_output.shape
    if target.ndim == net_output.ndim:
        target = target[:, 0]
    # int8 labels save HBM bytes; int32 when C could not be represented.
    label_dtype = jnp.int8 if C <= 127 else jnp.int32
    y = target.astype(label_dtype).reshape(B, 1, H, W)

    itemsize = jnp.dtype(net_output.dtype).itemsize
    lbl_isize = jnp.dtype(label_dtype).itemsize

    # Spatial tiling along H: multiple of 32 rows (satisfies f32/bf16/int8
    # sublane tiling) or the full H; sized to ~target_tile_bytes of logits.
    th = int(target_tile_bytes) // max(1, C * W * itemsize)
    th = max(32, (th // 32) * 32)
    tile_h = min(th, H)
    n_tiles = -(-H // tile_h)
    ragged = (H % tile_h) != 0

    # VMEM budget: double-buffered inputs + e scratch + a few f32 slabs.
    slab = tile_h * W * 4
    est = (2 * (C * tile_h * W * itemsize + tile_h * W * lbl_isize)
           + C * slab + 6 * slab + (2 << 20))
    vmem_limit = int(min(max(est, 32 << 20), 96 << 20))

    kernel = functools.partial(
        _dc_ce_kernel, n_classes=C, h_total=H, tile_h=tile_h,
        ragged=ragged, approx_recip=approx_reciprocal)

    # NOTE: for B == 1 on v7x (2 TensorCores) one could additionally split the
    # tile axis into a small leading "parallel" factor; not done here to keep
    # the accumulator pattern simple (typical training batches have B >= 2).
    stats = pl.pallas_call(
        kernel,
        out_shape=jax.ShapeDtypeStruct((B, C, 4), jnp.float32),
        grid=(B, n_tiles),
        in_specs=[
            pl.BlockSpec((1, C, tile_h, W), lambda b, i: (b, 0, i, 0)),
            pl.BlockSpec((1, 1, tile_h, W), lambda b, i: (b, 0, i, 0)),
        ],
        out_specs=pl.BlockSpec((1, C, 4), lambda b, i: (b, 0, 0)),
        scratch_shapes=[pltpu.VMEM((C, tile_h, W), jnp.float32)],
        compiler_params=pltpu.CompilerParams(
            dimension_semantics=("parallel", "arbitrary"),
            vmem_limit_bytes=vmem_limit),
    )(net_output, y)

    tp = stats[:, :, 0]
    p_sum = stats[:, :, 1]
    oh = stats[:, :, 2]
    ce_sum = jnp.sum(stats[:, 0, 3])

    # CrossEntropyLoss (reduction='mean' over all B*H*W pixels).
    ce_loss = ce_sum / (B * H * W)

    # SoftDiceLoss (batch_dice=False, do_bg=True, smooth=1.0).
    fp = p_sum - tp                       # sum(p * (1 - onehot))
    fn = oh - tp                          # sum((1 - p) * onehot)
    nominator = 2.0 * tp + smooth
    denominator = 2.0 * tp + fp + fn + smooth
    dc = nominator / (denominator + 1e-8)
    dc_loss = -jnp.mean(dc)

    # aggregate == 'sum'
    return weight_ce * ce_loss + weight_dice * dc_loss


def _reference_loss(net_output, target, *, smooth=1.0):
    """Pure-JAX reference matching the PyTorch module semantics."""
    B, C, H, W = net_output.shape
    x = net_output.astype(jnp.float32)
    labels = target[:, 0].astype(jnp.int32)                        # (B, H, W)
    onehot = jax.nn.one_hot(labels, C, axis=1, dtype=jnp.float32)  # (B,C,H,W)

    p = jax.nn.softmax(x, axis=1)
    tp = jnp.sum(p * onehot, axis=(2, 3))
    fp = jnp.sum(p * (1.0 - onehot), axis=(2, 3))
    fn = jnp.sum((1.0 - p) * onehot, axis=(2, 3))
    dc = (2 * tp + smooth) / (2 * tp + fp + fn + smooth + 1e-8)
    dc_loss = -jnp.mean(dc)

    log_sm = jax.nn.log_softmax(x, axis=1)
    ce_loss = -jnp.mean(jnp.sum(log_sm * onehot, axis=1))
    return ce_loss + dc_loss


if __name__ == "__main__":
    key = jax.random.PRNGKey(0)
    k1, k2, k3, k4 = jax.random.split(key, 4)

    # Primary check: B=2, C=4, 16x16 (single spatial tile, approx reciprocal).
    B, C, H, W = 2, 4, 16, 16
    net_output = jax.random.normal(k1, (B, C, H, W), dtype=jnp.float32)
    target = jax.random.randint(k2, (B, 1, H, W), 0, C).astype(jnp.float32)

    loss = jax.block_until_ready(dc_and_ce_loss(net_output, target))
    ref = jax.block_until_ready(_reference_loss(net_output, target))
    assert jnp.allclose(loss, ref, atol=2e-3, rtol=2e-3), (loss, ref)

    # Secondary check: multi-tile + ragged last tile + accumulator path
    # (tiny tile budget forces 2 tiles over H=40), exact reciprocal.
    B2, C2, H2, W2 = 2, 3, 40, 24
    x2 = jax.random.normal(k3, (B2, C2, H2, W2), dtype=jnp.float32)
    t2 = jax.random.randint(k4, (B2, 1, H2, W2), 0, C2).astype(jnp.float32)
    loss2 = jax.block_until_ready(
        dc_and_ce_loss(x2, t2, target_tile_bytes=1, approx_reciprocal=False))
    ref2 = jax.block_until_ready(_reference_loss(x2, t2))
    assert jnp.allclose(loss2, ref2, atol=5e-4, rtol=5e-4), (loss2, ref2)

    print("KERNEL_OK")
</pallas_src>

<mosaic_0001>
module attributes {stable_mosaic.version = 11 : i64} {
  func.func @_dc_ce_kernel(%arg0: i32, %arg1: i32, %arg2: memref<1x4x16x16xf32, #tpu.memory_space<vmem>>, %arg3: memref<1x1x16x16xi8, #tpu.memory_space<vmem>>, %arg4: memref<1x4x4xf32, #tpu.memory_space<vmem>>, %arg5: memref<4x16x16xf32, #tpu.memory_space<vmem>>) attributes {dimension_semantics = [#tpu.dimension_semantics<parallel>, #tpu.dimension_semantics<arbitrary>], iteration_bounds = array<i64: 2, 1>, scalar_prefetch = 0 : i64, scratch_operands = 1 : i64, tpu.core_type = #tpu.core_type<tc>, window_params = [{transform_indices = @transform_0, window_bounds = array<i64: 1, 4, 16, 16>}, {transform_indices = @transform_1, window_bounds = array<i64: 1, 1, 16, 16>}, {transform_indices = @transform_2, window_bounds = array<i64: 1, 4, 4>}]} {
    %c0_i32 = arith.constant 0 : i32
    %0 = arith.cmpi eq, %arg1, %c0_i32 : i32
    %1 = arith.extui %0 : i1 to i32
    %c0_i32_0 = arith.constant 0 : i32
    %2 = arith.cmpi ne, %1, %c0_i32_0 : i32
    scf.if %2 {
      %cst_184 = arith.constant 0.000000e+00 : f32
      %249 = vector.broadcast %cst_184 : f32 to vector<1x4x4xf32>
      %c0_185 = arith.constant 0 : index
      %c0_186 = arith.constant 0 : index
      %c0_187 = arith.constant 0 : index
      %250 = vector.load %arg4[%c0_185, %c0_186, %c0_187] : memref<1x4x4xf32, #tpu.memory_space<vmem>>, vector<1x4x4xf32>
      tpu.vector_store %arg4[%c0_185, %c0_186, %c0_187], %249 {strides = array<i32>} : memref<1x4x4xf32, #tpu.memory_space<vmem>>, vector<1x4x4xf32>,
    } else {
    }
    %c0 = arith.constant 0 : index
    %c0_1 = arith.constant 0 : index
    %c0_2 = arith.constant 0 : index
    %c0_3 = arith.constant 0 : index
    %3 = vector.load %arg3[%c0, %c0_1, %c0_2, %c0_3] : memref<1x1x16x16xi8, #tpu.memory_space<vmem>>, vector<1x1x16x16xi8>
    %4 = vector.shape_cast %3 : vector<1x1x16x16xi8> to vector<16x16xi8>
    %5 = arith.extsi %4 : vector<16x16xi8> to vector<16x16xi32>
    %c0_4 = arith.constant 0 : index
    %c0_5 = arith.constant 0 : index
    %c0_6 = arith.constant 0 : index
    %c0_7 = arith.constant 0 : index
    %6 = vector.load %arg2[%c0_4, %c0_5, %c0_6, %c0_7] : memref<1x4x16x16xf32, #tpu.memory_space<vmem>>, vector<1x1x16x16xf32>
    %7 = vector.shape_cast %6 : vector<1x1x16x16xf32> to vector<16x16xf32>
    %c0_8 = arith.constant 0 : index
    %c1 = arith.constant 1 : index
    %c0_9 = arith.constant 0 : index
    %c0_10 = arith.constant 0 : index
    %8 = vector.load %arg2[%c0_8, %c1, %c0_9, %c0_10] : memref<1x4x16x16xf32, #tpu.memory_space<vmem>>, vector<1x1x16x16xf32>
    %9 = vector.shape_cast %8 : vector<1x1x16x16xf32> to vector<16x16xf32>
    %10 = arith.maximumf %7, %9 : vector<16x16xf32>
    %c0_11 = arith.constant 0 : index
    %c2 = arith.constant 2 : index
    %c0_12 = arith.constant 0 : index
    %c0_13 = arith.constant 0 : index
    %11 = vector.load %arg2[%c0_11, %c2, %c0_12, %c0_13] : memref<1x4x16x16xf32, #tpu.memory_space<vmem>>, vector<1x1x16x16xf32>
    %12 = vector.shape_cast %11 : vector<1x1x16x16xf32> to vector<16x16xf32>
    %13 = arith.maximumf %10, %12 : vector<16x16xf32>
    %c0_14 = arith.constant 0 : index
    %c3 = arith.constant 3 : index
    %c0_15 = arith.constant 0 : index
    %c0_16 = arith.constant 0 : index
    %14 = vector.load %arg2[%c0_14, %c3, %c0_15, %c0_16] : memref<1x4x16x16xf32, #tpu.memory_space<vmem>>, vector<1x1x16x16xf32>
    %15 = vector.shape_cast %14 : vector<1x1x16x16xf32> to vector<16x16xf32>
    %16 = arith.maximumf %13, %15 : vector<16x16xf32>
    %cst = arith.constant 0.000000e+00 : f32
    %17 = vector.broadcast %cst : f32 to vector<16x16xf32>
    %c0_17 = arith.constant 0 : index
    %c0_18 = arith.constant 0 : index
    %c0_19 = arith.constant 0 : index
    %c0_20 = arith.constant 0 : index
    %18 = vector.load %arg2[%c0_17, %c0_18, %c0_19, %c0_20] : memref<1x4x16x16xf32, #tpu.memory_space<vmem>>, vector<1x1x16x16xf32>
    %19 = vector.shape_cast %18 : vector<1x1x16x16xf32> to vector<16x16xf32>
    %20 = arith.subf %19, %16 : vector<16x16xf32>
    %21 = math.exp %20 : vector<16x16xf32>
    %c0_21 = arith.constant 0 : index
    %c0_22 = arith.constant 0 : index
    %c0_23 = arith.constant 0 : index
    %22 = vector.load %arg5[%c0_21, %c0_22, %c0_23] : memref<4x16x16xf32, #tpu.memory_space<vmem>>, vector<1x16x16xf32>
    %23 = vector.shape_cast %22 : vector<1x16x16xf32> to vector<16x16xf32>
    %24 = vector.shape_cast %21 : vector<16x16xf32> to vector<1x16x16xf32>
    tpu.vector_store %arg5[%c0_21, %c0_22, %c0_23], %24 {strides = array<i32>} : memref<4x16x16xf32, #tpu.memory_space<vmem>>, vector<1x16x16xf32>,
    %c0_i32_24 = arith.constant 0 : i32
    %25 = vector.broadcast %c0_i32_24 : i32 to vector<16x16xi32>
    %26 = arith.cmpi eq, %5, %25 : vector<16x16xi32>
    %cst_25 = arith.constant 0.000000e+00 : f32
    %27 = vector.broadcast %cst_25 : f32 to vector<16x16xf32>
    %28 = arith.select %26, %20, %27 : vector<16x16xi1>, vector<16x16xf32>
    %29 = arith.addf %17, %28 : vector<16x16xf32>
    %cst_26 = arith.constant 1.000000e+00 : f32
    %cst_27 = arith.constant 0.000000e+00 : f32
    %30 = vector.broadcast %cst_26 : f32 to vector<16x16xf32>
    %31 = vector.broadcast %cst_27 : f32 to vector<16x16xf32>
    %32 = arith.select %26, %30, %31 : vector<16x16xi1>, vector<16x16xf32>
    %cst_28 = arith.constant dense<0.000000e+00> : vector<16xf32>
    %33 = vector.multi_reduction <add>, %32, %cst_28 [1] : vector<16x16xf32> to vector<16xf32>
    %34 = vector.shape_cast %33 : vector<16xf32> to vector<16x1xf32>
    %cst_29 = arith.constant dense<0.000000e+00> : vector<1xf32>
    %35 = vector.multi_reduction <add>, %34, %cst_29 [0] : vector<16x1xf32> to vector<1xf32>
    %36 = vector.shape_cast %35 : vector<1xf32> to vector<1x1xf32>
    %c0_30 = arith.constant 0 : index
    %c0_31 = arith.constant 0 : index
    %c2_32 = arith.constant 2 : index
    %37 = vector.load %arg4[%c0_30, %c0_31, %c2_32] : memref<1x4x4xf32, #tpu.memory_space<vmem>>, vector<1x1x1xf32>
    %38 = vector.shape_cast %37 : vector<1x1x1xf32> to vector<1x1xf32>
    %39 = arith.addf %38, %36 : vector<1x1xf32>
    %c0_33 = arith.constant 0 : index
    %c0_34 = arith.constant 0 : index
    %c2_35 = arith.constant 2 : index
    %40 = vector.load %arg4[%c0_33, %c0_34, %c2_35] : memref<1x4x4xf32, #tpu.memory_space<vmem>>, vector<1x1x1xf32>
    %41 = vector.shape_cast %40 : vector<1x1x1xf32> to vector<1x1xf32>
    %42 = vector.shape_cast %39 : vector<1x1xf32> to vector<1x1x1xf32>
    tpu.vector_store %arg4[%c0_33, %c0_34, %c2_35], %42 {strides = array<i32>} : memref<1x4x4xf32, #tpu.memory_space<vmem>>, vector<1x1x1xf32>,
    %c0_36 = arith.constant 0 : index
    %c1_37 = arith.constant 1 : index
    %c0_38 = arith.constant 0 : index
    %c0_39 = arith.constant 0 : index
    %43 = vector.load %arg2[%c0_36, %c1_37, %c0_38, %c0_39] : memref<1x4x16x16xf32, #tpu.memory_space<vmem>>, vector<1x1x16x16xf32>
    %44 = vector.shape_cast %43 : vector<1x1x16x16xf32> to vector<16x16xf32>
    %45 = arith.subf %44, %16 : vector<16x16xf32>
    %46 = math.exp %45 : vector<16x16xf32>
    %c1_40 = arith.constant 1 : index
    %c0_41 = arith.constant 0 : index
    %c0_42 = arith.constant 0 : index
    %47 = vector.load %arg5[%c1_40, %c0_41, %c0_42] : memref<4x16x16xf32, #tpu.memory_space<vmem>>, vector<1x16x16xf32>
    %48 = vector.shape_cast %47 : vector<1x16x16xf32> to vector<16x16xf32>
    %49 = vector.shape_cast %46 : vector<16x16xf32> to vector<1x16x16xf32>
    tpu.vector_store %arg5[%c1_40, %c0_41, %c0_42], %49 {strides = array<i32>} : memref<4x16x16xf32, #tpu.memory_space<vmem>>, vector<1x16x16xf32>,
    %50 = arith.addf %21, %46 : vector<16x16xf32>
    %c1_i32 = arith.constant 1 : i32
    %51 = vector.broadcast %c1_i32 : i32 to vector<16x16xi32>
    %52 = arith.cmpi eq, %5, %51 : vector<16x16xi32>
    %cst_43 = arith.constant 0.000000e+00 : f32
    %53 = vector.broadcast %cst_43 : f32 to vector<16x16xf32>
    %54 = arith.select %52, %45, %53 : vector<16x16xi1>, vector<16x16xf32>
    %55 = arith.addf %29, %54 : vector<16x16xf32>
    %cst_44 = arith.constant 1.000000e+00 : f32
    %cst_45 = arith.constant 0.000000e+00 : f32
    %56 = vector.broadcast %cst_44 : f32 to vector<16x16xf32>
    %57 = vector.broadcast %cst_45 : f32 to vector<16x16xf32>
    %58 = arith.select %52, %56, %57 : vector<16x16xi1>, vector<16x16xf32>
    %cst_46 = arith.constant dense<0.000000e+00> : vector<16xf32>
    %59 = vector.multi_reduction <add>, %58, %cst_46 [1] : vector<16x16xf32> to vector<16xf32>
    %60 = vector.shape_cast %59 : vector<16xf32> to vector<16x1xf32>
    %cst_47 = arith.constant dense<0.000000e+00> : vector<1xf32>
    %61 = vector.multi_reduction <add>, %60, %cst_47 [0] : vector<16x1xf32> to vector<1xf32>
    %62 = vector.shape_cast %61 : vector<1xf32> to vector<1x1xf32>
    %c0_48 = arith.constant 0 : index
    %c1_49 = arith.constant 1 : index
    %c2_50 = arith.constant 2 : index
    %63 = vector.load %arg4[%c0_48, %c1_49, %c2_50] : memref<1x4x4xf32, #tpu.memory_space<vmem>>, vector<1x1x1xf32>
    %64 = vector.shape_cast %63 : vector<1x1x1xf32> to vector<1x1xf32>
    %65 = arith.addf %64, %62 : vector<1x1xf32>
    %c0_51 = arith.constant 0 : index
    %c1_52 = arith.constant 1 : index
    %c2_53 = arith.constant 2 : index
    %66 = vector.load %arg4[%c0_51, %c1_52, %c2_53] : memref<1x4x4xf32, #tpu.memory_space<vmem>>, vector<1x1x1xf32>
    %67 = vector.shape_cast %66 : vector<1x1x1xf32> to vector<1x1xf32>
    %68 = vector.shape_cast %65 : vector<1x1xf32> to vector<1x1x1xf32>
    tpu.vector_store %arg4[%c0_51, %c1_52, %c2_53], %68 {strides = array<i32>} : memref<1x4x4xf32, #tpu.memory_space<vmem>>, vector<1x1x1xf32>,
    %c0_54 = arith.constant 0 : index
    %c2_55 = arith.constant 2 : index
    %c0_56 = arith.constant 0 : index
    %c0_57 = arith.constant 0 : index
    %69 = vector.load %arg2[%c0_54, %c2_55, %c0_56, %c0_57] : memref<1x4x16x16xf32, #tpu.memory_space<vmem>>, vector<1x1x16x16xf32>
    %70 = vector.shape_cast %69 : vector<1x1x16x16xf32> to vector<16x16xf32>
    %71 = arith.subf %70, %16 : vector<16x16xf32>
    %72 = math.exp %71 : vector<16x16xf32>
    %c2_58 = arith.constant 2 : index
    %c0_59 = arith.constant 0 : index
    %c0_60 = arith.constant 0 : index
    %73 = vector.load %arg5[%c2_58, %c0_59, %c0_60] : memref<4x16x16xf32, #tpu.memory_space<vmem>>, vector<1x16x16xf32>
    %74 = vector.shape_cast %73 : vector<1x16x16xf32> to vector<16x16xf32>
    %75 = vector.shape_cast %72 : vector<16x16xf32> to vector<1x16x16xf32>
    tpu.vector_store %arg5[%c2_58, %c0_59, %c0_60], %75 {strides = array<i32>} : memref<4x16x16xf32, #tpu.memory_space<vmem>>, vector<1x16x16xf32>,
    %76 = arith.addf %50, %72 : vector<16x16xf32>
    %c2_i32 = arith.constant 2 : i32
    %77 = vector.broadcast %c2_i32 : i32 to vector<16x16xi32>
    %78 = arith.cmpi eq, %5, %77 : vector<16x16xi32>
    %cst_61 = arith.constant 0.000000e+00 : f32
    %79 = vector.broadcast %cst_61 : f32 to vector<16x16xf32>
    %80 = arith.select %78, %71, %79 : vector<16x16xi1>, vector<16x16xf32>
    %81 = arith.addf %55, %80 : vector<16x16xf32>
    %cst_62 = arith.constant 1.000000e+00 : f32
    %cst_63 = arith.constant 0.000000e+00 : f32
    %82 = vector.broadcast %cst_62 : f32 to vector<16x16xf32>
    %83 = vector.broadcast %cst_63 : f32 to vector<16x16xf32>
    %84 = arith.select %78, %82, %83 : vector<16x16xi1>, vector<16x16xf32>
    %cst_64 = arith.constant dense<0.000000e+00> : vector<16xf32>
    %85 = vector.multi_reduction <add>, %84, %cst_64 [1] : vector<16x16xf32> to vector<16xf32>
    %86 = vector.shape_cast %85 : vector<16xf32> to vector<16x1xf32>
    %cst_65 = arith.constant dense<0.000000e+00> : vector<1xf32>
    %87 = vector.multi_reduction <add>, %86, %cst_65 [0] : vector<16x1xf32> to vector<1xf32>
    %88 = vector.shape_cast %87 : vector<1xf32> to vector<1x1xf32>
    %c0_66 = arith.constant 0 : index
    %c2_67 = arith.constant 2 : index
    %c2_68 = arith.constant 2 : index
    %89 = vector.load %arg4[%c0_66, %c2_67, %c2_68] : memref<1x4x4xf32, #tpu.memory_space<vmem>>, vector<1x1x1xf32>
    %90 = vector.shape_cast %89 : vector<1x1x1xf32> to vector<1x1xf32>
    %91 = arith.addf %90, %88 : vector<1x1xf32>
    %c0_69 = arith.constant 0 : index
    %c2_70 = arith.constant 2 : index
    %c2_71 = arith.constant 2 : index
    %92 = vector.load %arg4[%c0_69, %c2_70, %c2_71] : memref<1x4x4xf32, #tpu.memory_space<vmem>>, vector<1x1x1xf32>
    %93 = vector.shape_cast %92 : vector<1x1x1xf32> to vector<1x1xf32>
    %94 = vector.shape_cast %91 : vector<1x1xf32> to vector<1x1x1xf32>
    tpu.vector_store %arg4[%c0_69, %c2_70, %c2_71], %94 {strides = array<i32>} : memref<1x4x4xf32, #tpu.memory_space<vmem>>, vector<1x1x1xf32>,
    %c0_72 = arith.constant 0 : index
    %c3_73 = arith.constant 3 : index
    %c0_74 = arith.constant 0 : index
    %c0_75 = arith.constant 0 : index
    %95 = vector.load %arg2[%c0_72, %c3_73, %c0_74, %c0_75] : memref<1x4x16x16xf32, #tpu.memory_space<vmem>>, vector<1x1x16x16xf32>
    %96 = vector.shape_cast %95 : vector<1x1x16x16xf32> to vector<16x16xf32>
    %97 = arith.subf %96, %16 : vector<16x16xf32>
    %98 = math.exp %97 : vector<16x16xf32>
    %c3_76 = arith.constant 3 : index
    %c0_77 = arith.constant 0 : index
    %c0_78 = arith.constant 0 : index
    %99 = vector.load %arg5[%c3_76, %c0_77, %c0_78] : memref<4x16x16xf32, #tpu.memory_space<vmem>>, vector<1x16x16xf32>
    %100 = vector.shape_cast %99 : vector<1x16x16xf32> to vector<16x16xf32>
    %101 = vector.shape_cast %98 : vector<16x16xf32> to vector<1x16x16xf32>
    tpu.vector_store %arg5[%c3_76, %c0_77, %c0_78], %101 {strides = array<i32>} : memref<4x16x16xf32, #tpu.memory_space<vmem>>, vector<1x16x16xf32>,
    %102 = arith.addf %76, %98 : vector<16x16xf32>
    %c3_i32 = arith.constant 3 : i32
    %103 = vector.broadcast %c3_i32 : i32 to vector<16x16xi32>
    %104 = arith.cmpi eq, %5, %103 : vector<16x16xi32>
    %cst_79 = arith.constant 0.000000e+00 : f32
    %105 = vector.broadcast %cst_79 : f32 to vector<16x16xf32>
    %106 = arith.select %104, %97, %105 : vector<16x16xi1>, vector<16x16xf32>
    %107 = arith.addf %81, %106 : vector<16x16xf32>
    %cst_80 = arith.constant 1.000000e+00 : f32
    %cst_81 = arith.constant 0.000000e+00 : f32
    %108 = vector.broadcast %cst_80 : f32 to vector<16x16xf32>
    %109 = vector.broadcast %cst_81 : f32 to vector<16x16xf32>
    %110 = arith.select %104, %108, %109 : vector<16x16xi1>, vector<16x16xf32>
    %cst_82 = arith.constant dense<0.000000e+00> : vector<16xf32>
    %111 = vector.multi_reduction <add>, %110, %cst_82 [1] : vector<16x16xf32> to vector<16xf32>
    %112 = vector.shape_cast %111 : vector<16xf32> to vector<16x1xf32>
    %cst_83 = arith.constant dense<0.000000e+00> : vector<1xf32>
    %113 = vector.multi_reduction <add>, %112, %cst_83 [0] : vector<16x1xf32> to vector<1xf32>
    %114 = vector.shape_cast %113 : vector<1xf32> to vector<1x1xf32>
    %c0_84 = arith.constant 0 : index
    %c3_85 = arith.constant 3 : index
    %c2_86 = arith.constant 2 : index
    %115 = vector.load %arg4[%c0_84, %c3_85, %c2_86] : memref<1x4x4xf32, #tpu.memory_space<vmem>>, vector<1x1x1xf32>
    %116 = vector.shape_cast %115 : vector<1x1x1xf32> to vector<1x1xf32>
    %117 = arith.addf %116, %114 : vector<1x1xf32>
    %c0_87 = arith.constant 0 : index
    %c3_88 = arith.constant 3 : index
    %c2_89 = arith.constant 2 : index
    %118 = vector.load %arg4[%c0_87, %c3_88, %c2_89] : memref<1x4x4xf32, #tpu.memory_space<vmem>>, vector<1x1x1xf32>
    %119 = vector.shape_cast %118 : vector<1x1x1xf32> to vector<1x1xf32>
    %120 = vector.shape_cast %117 : vector<1x1xf32> to vector<1x1x1xf32>
    tpu.vector_store %arg4[%c0_87, %c3_88, %c2_89], %120 {strides = array<i32>} : memref<1x4x4xf32, #tpu.memory_space<vmem>>, vector<1x1x1xf32>,
    %121 = tpu.reciprocal %102 {approx = true} : vector<16x16xf32> -> vector<16x16xf32>
    %122 = math.log %102 : vector<16x16xf32>
    %c0_i32_90 = arith.constant 0 : i32
    %123 = vector.broadcast %c0_i32_90 : i32 to vector<16x16xi32>
    %124 = arith.cmpi sge, %5, %123 : vector<16x16xi32>
    %c4_i32 = arith.constant 4 : i32
    %125 = vector.broadcast %c4_i32 : i32 to vector<16x16xi32>
    %126 = arith.cmpi slt, %5, %125 : vector<16x16xi32>
    %127 = arith.andi %124, %126 : vector<16x16xi1>
    %128 = arith.subf %122, %107 : vector<16x16xf32>
    %cst_91 = arith.constant 0.000000e+00 : f32
    %129 = vector.broadcast %cst_91 : f32 to vector<16x16xf32>
    %130 = arith.select %127, %128, %129 : vector<16x16xi1>, vector<16x16xf32>
    %cst_92 = arith.constant dense<0.000000e+00> : vector<16xf32>
    %131 = vector.multi_reduction <add>, %130, %cst_92 [1] : vector<16x16xf32> to vector<16xf32>
    %132 = vector.shape_cast %131 : vector<16xf32> to vector<16x1xf32>
    %cst_93 = arith.constant dense<0.000000e+00> : vector<1xf32>
    %133 = vector.multi_reduction <add>, %132, %cst_93 [0] : vector<16x1xf32> to vector<1xf32>
    %134 = vector.shape_cast %133 : vector<1xf32> to vector<1x1xf32>
    %c0_94 = arith.constant 0 : index
    %c0_95 = arith.constant 0 : index
    %c3_96 = arith.constant 3 : index
    %135 = vector.load %arg4[%c0_94, %c0_95, %c3_96] : memref<1x4x4xf32, #tpu.memory_space<vmem>>, vector<1x1x1xf32>
    %136 = vector.shape_cast %135 : vector<1x1x1xf32> to vector<1x1xf32>
    %137 = arith.addf %136, %134 : vector<1x1xf32>
    %c0_97 = arith.constant 0 : index
    %c0_98 = arith.constant 0 : index
    %c3_99 = arith.constant 3 : index
    %138 = vector.load %arg4[%c0_97, %c0_98, %c3_99] : memref<1x4x4xf32, #tpu.memory_space<vmem>>, vector<1x1x1xf32>
    %139 = vector.shape_cast %138 : vector<1x1x1xf32> to vector<1x1xf32>
    %140 = vector.shape_cast %137 : vector<1x1xf32> to vector<1x1x1xf32>
    tpu.vector_store %arg4[%c0_97, %c0_98, %c3_99], %140 {strides = array<i32>} : memref<1x4x4xf32, #tpu.memory_space<vmem>>, vector<1x1x1xf32>,
    %c0_100 = arith.constant 0 : index
    %c0_101 = arith.constant 0 : index
    %c0_102 = arith.constant 0 : index
    %141 = vector.load %arg5[%c0_100, %c0_101, %c0_102] : memref<4x16x16xf32, #tpu.memory_space<vmem>>, vector<1x16x16xf32>
    %142 = vector.shape_cast %141 : vector<1x16x16xf32> to vector<16x16xf32>
    %143 = arith.mulf %142, %121 : vector<16x16xf32>
    %c0_i32_103 = arith.constant 0 : i32
    %144 = vector.broadcast %c0_i32_103 : i32 to vector<16x16xi32>
    %145 = arith.cmpi eq, %5, %144 : vector<16x16xi32>
    %cst_104 = arith.constant 0.000000e+00 : f32
    %146 = vector.broadcast %cst_104 : f32 to vector<16x16xf32>
    %147 = arith.select %145, %143, %146 : vector<16x16xi1>, vector<16x16xf32>
    %cst_105 = arith.constant dense<0.000000e+00> : vector<16xf32>
    %148 = vector.multi_reduction <add>, %147, %cst_105 [1] : vector<16x16xf32> to vector<16xf32>
    %149 = vector.shape_cast %148 : vector<16xf32> to vector<16x1xf32>
    %cst_106 = arith.constant dense<0.000000e+00> : vector<1xf32>
    %150 = vector.multi_reduction <add>, %149, %cst_106 [0] : vector<16x1xf32> to vector<1xf32>
    %151 = vector.shape_cast %150 : vector<1xf32> to vector<1x1xf32>
    %cst_107 = arith.constant dense<0.000000e+00> : vector<16xf32>
    %152 = vector.multi_reduction <add>, %143, %cst_107 [1] : vector<16x16xf32> to vector<16xf32>
    %153 = vector.shape_cast %152 : vector<16xf32> to vector<16x1xf32>
    %cst_108 = arith.constant dense<0.000000e+00> : vector<1xf32>
    %154 = vector.multi_reduction <add>, %153, %cst_108 [0] : vector<16x1xf32> to vector<1xf32>
    %155 = vector.shape_cast %154 : vector<1xf32> to vector<1x1xf32>
    %c0_109 = arith.constant 0 : index
    %c0_110 = arith.constant 0 : index
    %c0_111 = arith.constant 0 : index
    %156 = vector.load %arg4[%c0_109, %c0_110, %c0_111] : memref<1x4x4xf32, #tpu.memory_space<vmem>>, vector<1x1x1xf32>
    %157 = vector.shape_cast %156 : vector<1x1x1xf32> to vector<1x1xf32>
    %158 = arith.addf %157, %151 : vector<1x1xf32>
    %c0_112 = arith.constant 0 : index
    %c0_113 = arith.constant 0 : index
    %c0_114 = arith.constant 0 : index
    %159 = vector.load %arg4[%c0_112, %c0_113, %c0_114] : memref<1x4x4xf32, #tpu.memory_space<vmem>>, vector<1x1x1xf32>
    %160 = vector.shape_cast %159 : vector<1x1x1xf32> to vector<1x1xf32>
    %161 = vector.shape_cast %158 : vector<1x1xf32> to vector<1x1x1xf32>
    tpu.vector_store %arg4[%c0_112, %c0_113, %c0_114], %161 {strides = array<i32>} : memref<1x4x4xf32, #tpu.memory_space<vmem>>, vector<1x1x1xf32>,
    %c0_115 = arith.constant 0 : index
    %c0_116 = arith.constant 0 : index
    %c1_117 = arith.constant 1 : index
    %162 = vector.load %arg4[%c0_115, %c0_116, %c1_117] : memref<1x4x4xf32, #tpu.memory_space<vmem>>, vector<1x1x1xf32>
    %163 = vector.shape_cast %162 : vector<1x1x1xf32> to vector<1x1xf32>
    %164 = arith.addf %163, %155 : vector<1x1xf32>
    %c0_118 = arith.constant 0 : index
    %c0_119 = arith.constant 0 : index
    %c1_120 = arith.constant 1 : index
    %165 = vector.load %arg4[%c0_118, %c0_119, %c1_120] : memref<1x4x4xf32, #tpu.memory_space<vmem>>, vector<1x1x1xf32>
    %166 = vector.shape_cast %165 : vector<1x1x1xf32> to vector<1x1xf32>
    %167 = vector.shape_cast %164 : vector<1x1xf32> to vector<1x1x1xf32>
    tpu.vector_store %arg4[%c0_118, %c0_119, %c1_120], %167 {strides = array<i32>} : memref<1x4x4xf32, #tpu.memory_space<vmem>>, vector<1x1x1xf32>,
    %c1_121 = arith.constant 1 : index
    %c0_122 = arith.constant 0 : index
    %c0_123 = arith.constant 0 : index
    %168 = vector.load %arg5[%c1_121, %c0_122, %c0_123] : memref<4x16x16xf32, #tpu.memory_space<vmem>>, vector<1x16x16xf32>
    %169 = vector.shape_cast %168 : vector<1x16x16xf32> to vector<16x16xf32>
    %170 = arith.mulf %169, %121 : vector<16x16xf32>
    %c1_i32_124 = arith.constant 1 : i32
    %171 = vector.broadcast %c1_i32_124 : i32 to vector<16x16xi32>
    %172 = arith.cmpi eq, %5, %171 : vector<16x16xi32>
    %cst_125 = arith.constant 0.000000e+00 : f32
    %173 = vector.broadcast %cst_125 : f32 to vector<16x16xf32>
    %174 = arith.select %172, %170, %173 : vector<16x16xi1>, vector<16x16xf32>
    %cst_126 = arith.constant dense<0.000000e+00> : vector<16xf32>
    %175 = vector.multi_reduction <add>, %174, %cst_126 [1] : vector<16x16xf32> to vector<16xf32>
    %176 = vector.shape_cast %175 : vector<16xf32> to vector<16x1xf32>
    %cst_127 = arith.constant dense<0.000000e+00> : vector<1xf32>
    %177 = vector.multi_reduction <add>, %176, %cst_127 [0] : vector<16x1xf32> to vector<1xf32>
    %178 = vector.shape_cast %177 : vector<1xf32> to vector<1x1xf32>
    %cst_128 = arith.constant dense<0.000000e+00> : vector<16xf32>
    %179 = vector.multi_reduction <add>, %170, %cst_128 [1] : vector<16x16xf32> to vector<16xf32>
    %180 = vector.shape_cast %179 : vector<16xf32> to vector<16x1xf32>
    %cst_129 = arith.constant dense<0.000000e+00> : vector<1xf32>
    %181 = vector.multi_reduction <add>, %180, %cst_129 [0] : vector<16x1xf32> to vector<1xf32>
    %182 = vector.shape_cast %181 : vector<1xf32> to vector<1x1xf32>
    %c0_130 = arith.constant 0 : index
    %c1_131 = arith.constant 1 : index
    %c0_132 = arith.constant 0 : index
    %183 = vector.load %arg4[%c0_130, %c1_131, %c0_132] : memref<1x4x4xf32, #tpu.memory_space<vmem>>, vector<1x1x1xf32>
    %184 = vector.shape_cast %183 : vector<1x1x1xf32> to vector<1x1xf32>
    %185 = arith.addf %184, %178 : vector<1x1xf32>
    %c0_133 = arith.constant 0 : index
    %c1_134 = arith.constant 1 : index
    %c0_135 = arith.constant 0 : index
    %186 = vector.load %arg4[%c0_133, %c1_134, %c0_135] : memref<1x4x4xf32, #tpu.memory_space<vmem>>, vector<1x1x1xf32>
    %187 = vector.shape_cast %186 : vector<1x1x1xf32> to vector<1x1xf32>
    %188 = vector.shape_cast %185 : vector<1x1xf32> to vector<1x1x1xf32>
    tpu.vector_store %arg4[%c0_133, %c1_134, %c0_135], %188 {strides = array<i32>} : memref<1x4x4xf32, #tpu.memory_space<vmem>>, vector<1x1x1xf32>,
    %c0_136 = arith.constant 0 : index
    %c1_137 = arith.constant 1 : index
    %c1_138 = arith.constant 1 : index
    %189 = vector.load %arg4[%c0_136, %c1_137, %c1_138] : memref<1x4x4xf32, #tpu.memory_space<vmem>>, vector<1x1x1xf32>
    %190 = vector.shape_cast %189 : vector<1x1x1xf32> to vector<1x1xf32>
    %191 = arith.addf %190, %182 : vector<1x1xf32>
    %c0_139 = arith.constant 0 : index
    %c1_140 = arith.constant 1 : index
    %c1_141 = arith.constant 1 : index
    %192 = vector.load %arg4[%c0_139, %c1_140, %c1_141] : memref<1x4x4xf32, #tpu.memory_space<vmem>>, vector<1x1x1xf32>
    %193 = vector.shape_cast %192 : vector<1x1x1xf32> to vector<1x1xf32>
    %194 = vector.shape_cast %191 : vector<1x1xf32> to vector<1x1x1xf32>
    tpu.vector_store %arg4[%c0_139, %c1_140, %c1_141], %194 {strides = array<i32>} : memref<1x4x4xf32, #tpu.memory_space<vmem>>, vector<1x1x1xf32>,
    %c2_142 = arith.constant 2 : index
    %c0_143 = arith.constant 0 : index
    %c0_144 = arith.constant 0 : index
    %195 = vector.load %arg5[%c2_142, %c0_143, %c0_144] : memref<4x16x16xf32, #tpu.memory_space<vmem>>, vector<1x16x16xf32>
    %196 = vector.shape_cast %195 : vector<1x16x16xf32> to vector<16x16xf32>
    %197 = arith.mulf %196, %121 : vector<16x16xf32>
    %c2_i32_145 = arith.constant 2 : i32
    %198 = vector.broadcast %c2_i32_145 : i32 to vector<16x16xi32>
    %199 = arith.cmpi eq, %5, %198 : vector<16x16xi32>
    %cst_146 = arith.constant 0.000000e+00 : f32
    %200 = vector.broadcast %cst_146 : f32 to vector<16x16xf32>
    %201 = arith.select %199, %197, %200 : vector<16x16xi1>, vector<16x16xf32>
    %cst_147 = arith.constant dense<0.000000e+00> : vector<16xf32>
    %202 = vector.multi_reduction <add>, %201, %cst_147 [1] : vector<16x16xf32> to vector<16xf32>
    %203 = vector.shape_cast %202 : vector<16xf32> to vector<16x1xf32>
    %cst_148 = arith.constant dense<0.000000e+00> : vector<1xf32>
    %204 = vector.multi_reduction <add>, %203, %cst_148 [0] : vector<16x1xf32> to vector<1xf32>
    %205 = vector.shape_cast %204 : vector<1xf32> to vector<1x1xf32>
    %cst_149 = arith.constant dense<0.000000e+00> : vector<16xf32>
    %206 = vector.multi_reduction <add>, %197, %cst_149 [1] : vector<16x16xf32> to vector<16xf32>
    %207 = vector.shape_cast %206 : vector<16xf32> to vector<16x1xf32>
    %cst_150 = arith.constant dense<0.000000e+00> : vector<1xf32>
    %208 = vector.multi_reduction <add>, %207, %cst_150 [0] : vector<16x1xf32> to vector<1xf32>
    %209 = vector.shape_cast %208 : vector<1xf32> to vector<1x1xf32>
    %c0_151 = arith.constant 0 : index
    %c2_152 = arith.constant 2 : index
    %c0_153 = arith.constant 0 : index
    %210 = vector.load %arg4[%c0_151, %c2_152, %c0_153] : memref<1x4x4xf32, #tpu.memory_space<vmem>>, vector<1x1x1xf32>
    %211 = vector.shape_cast %210 : vector<1x1x1xf32> to vector<1x1xf32>
    %212 = arith.addf %211, %205 : vector<1x1xf32>
    %c0_154 = arith.constant 0 : index
    %c2_155 = arith.constant 2 : index
    %c0_156 = arith.constant 0 : index
    %213 = vector.load %arg4[%c0_154, %c2_155, %c0_156] : memref<1x4x4xf32, #tpu.memory_space<vmem>>, vector<1x1x1xf32>
    %214 = vector.shape_cast %213 : vector<1x1x1xf32> to vector<1x1xf32>
    %215 = vector.shape_cast %212 : vector<1x1xf32> to vector<1x1x1xf32>
    tpu.vector_store %arg4[%c0_154, %c2_155, %c0_156], %215 {strides = array<i32>} : memref<1x4x4xf32, #tpu.memory_space<vmem>>, vector<1x1x1xf32>,
    %c0_157 = arith.constant 0 : index
    %c2_158 = arith.constant 2 : index
    %c1_159 = arith.constant 1 : index
    %216 = vector.load %arg4[%c0_157, %c2_158, %c1_159] : memref<1x4x4xf32, #tpu.memory_space<vmem>>, vector<1x1x1xf32>
    %217 = vector.shape_cast %216 : vector<1x1x1xf32> to vector<1x1xf32>
    %218 = arith.addf %217, %209 : vector<1x1xf32>
    %c0_160 = arith.constant 0 : index
    %c2_161 = arith.constant 2 : index
    %c1_162 = arith.constant 1 : index
    %219 = vector.load %arg4[%c0_160, %c2_161, %c1_162] : memref<1x4x4xf32, #tpu.memory_space<vmem>>, vector<1x1x1xf32>
    %220 = vector.shape_cast %219 : vector<1x1x1xf32> to vector<1x1xf32>
    %221 = vector.shape_cast %218 : vector<1x1xf32> to vector<1x1x1xf32>
    tpu.vector_store %arg4[%c0_160, %c2_161, %c1_162], %221 {strides = array<i32>} : memref<1x4x4xf32, #tpu.memory_space<vmem>>, vector<1x1x1xf32>,
    %c3_163 = arith.constant 3 : index
    %c0_164 = arith.constant 0 : index
    %c0_165 = arith.constant 0 : index
    %222 = vector.load %arg5[%c3_163, %c0_164, %c0_165] : memref<4x16x16xf32, #tpu.memory_space<vmem>>, vector<1x16x16xf32>
    %223 = vector.shape_cast %222 : vector<1x16x16xf32> to vector<16x16xf32>
    %224 = arith.mulf %223, %121 : vector<16x16xf32>
    %c3_i32_166 = arith.constant 3 : i32
    %225 = vector.broadcast %c3_i32_166 : i32 to vector<16x16xi32>
    %226 = arith.cmpi eq, %5, %225 : vector<16x16xi32>
    %cst_167 = arith.constant 0.000000e+00 : f32
    %227 = vector.broadcast %cst_167 : f32 to vector<16x16xf32>
    %228 = arith.select %226, %224, %227 : vector<16x16xi1>, vector<16x16xf32>
    %cst_168 = arith.constant dense<0.000000e+00> : vector<16xf32>
    %229 = vector.multi_reduction <add>, %228, %cst_168 [1] : vector<16x16xf32> to vector<16xf32>
    %230 = vector.shape_cast %229 : vector<16xf32> to vector<16x1xf32>
    %cst_169 = arith.constant dense<0.000000e+00> : vector<1xf32>
    %231 = vector.multi_reduction <add>, %230, %cst_169 [0] : vector<16x1xf32> to vector<1xf32>
    %232 = vector.shape_cast %231 : vector<1xf32> to vector<1x1xf32>
    %cst_170 = arith.constant dense<0.000000e+00> : vector<16xf32>
    %233 = vector.multi_reduction <add>, %224, %cst_170 [1] : vector<16x16xf32> to vector<16xf32>
    %234 = vector.shape_cast %233 : vector<16xf32> to vector<16x1xf32>
    %cst_171 = arith.constant dense<0.000000e+00> : vector<1xf32>
    %235 = vector.multi_reduction <add>, %234, %cst_171 [0] : vector<16x1xf32> to vector<1xf32>
    %236 = vector.shape_cast %235 : vector<1xf32> to vector<1x1xf32>
    %c0_172 = arith.constant 0 : index
    %c3_173 = arith.constant 3 : index
    %c0_174 = arith.constant 0 : index
    %237 = vector.load %arg4[%c0_172, %c3_173, %c0_174] : memref<1x4x4xf32, #tpu.memory_space<vmem>>, vector<1x1x1xf32>
    %238 = vector.shape_cast %237 : vector<1x1x1xf32> to vector<1x1xf32>
    %239 = arith.addf %238, %232 : vector<1x1xf32>
    %c0_175 = arith.constant 0 : index
    %c3_176 = arith.constant 3 : index
    %c0_177 = arith.constant 0 : index
    %240 = vector.load %arg4[%c0_175, %c3_176, %c0_177] : memref<1x4x4xf32, #tpu.memory_space<vmem>>, vector<1x1x1xf32>
    %241 = vector.shape_cast %240 : vector<1x1x1xf32> to vector<1x1xf32>
    %242 = vector.shape_cast %239 : vector<1x1xf32> to vector<1x1x1xf32>
    tpu.vector_store %arg4[%c0_175, %c3_176, %c0_177], %242 {strides = array<i32>} : memref<1x4x4xf32, #tpu.memory_space<vmem>>, vector<1x1x1xf32>,
    %c0_178 = arith.constant 0 : index
    %c3_179 = arith.constant 3 : index
    %c1_180 = arith.constant 1 : index
    %243 = vector.load %arg4[%c0_178, %c3_179, %c1_180] : memref<1x4x4xf32, #tpu.memory_space<vmem>>, vector<1x1x1xf32>
    %244 = vector.shape_cast %243 : vector<1x1x1xf32> to vector<1x1xf32>
    %245 = arith.addf %244, %236 : vector<1x1xf32>
    %c0_181 = arith.constant 0 : index
    %c3_182 = arith.constant 3 : index
    %c1_183 = arith.constant 1 : index
    %246 = vector.load %arg4[%c0_181, %c3_182, %c1_183] : memref<1x4x4xf32, #tpu.memory_space<vmem>>, vector<1x1x1xf32>
    %247 = vector.shape_cast %246 : vector<1x1x1xf32> to vector<1x1xf32>
    %248 = vector.shape_cast %245 : vector<1x1xf32> to vector<1x1x1xf32>
    tpu.vector_store %arg4[%c0_181, %c3_182, %c1_183], %248 {strides = array<i32>} : memref<1x4x4xf32, #tpu.memory_space<vmem>>, vector<1x1x1xf32>,
    return
  }
  func.func @transform_0(%arg0: i32, %arg1: i32) -> (i32, i32, i32, i32) {
    %c0_i32 = arith.constant 0 : i32
    %c0_i32_0 = arith.constant 0 : i32
    %c0_i32_1 = arith.constant 0 : i32
    return %arg0, %c0_i32, %arg1, %c0_i32_0 : i32, i32, i32, i32
  }
  func.func @transform_1(%arg0: i32, %arg1: i32) -> (i32, i32, i32, i32) {
    %c0_i32 = arith.constant 0 : i32
    %c0_i32_0 = arith.constant 0 : i32
    %c0_i32_1 = arith.constant 0 : i32
    return %arg0, %c0_i32, %arg1, %c0_i32_0 : i32, i32, i32, i32
  }
  func.func @transform_2(%arg0: i32, %arg1: i32) -> (i32, i32, i32) {
    %c0_i32 = arith.constant 0 : i32
    %c0_i32_0 = arith.constant 0 : i32
    %c0_i32_1 = arith.constant 0 : i32
    return %arg0, %c0_i32, %c0_i32_0 : i32, i32, i32
  }
}

</mosaic_0001>

<llo_original>
// kernel: tpu_custom_call.1
$region0: #{tpu_custom_call.1}
  #allocation0 [shape = 'u32[]', space=smem, size = 0x4, offset = 0x4, fixed_abs, tag = 'smem constant byte address 0x4 - core index']
  #allocation1 [shape = 'u32[144,128]{1,0:T(1,128)}', space=vmem, size = 0x12000, scoped, tag = 'internal scratch']
  #allocation2 [shape = 'f32[4,16,16]{2,1,0:T(8,128)}', space=vmem, size = 0x8000, scoped, tag = 'scratch operand']
  %s0 = inlined_call_operand.hbm [shape: f32[2,4,16,16], index: 0, kind: input, shape index: {}]
  %s1 = inlined_call_operand.hbm [shape: s8[2,1,16,16], index: 1, kind: input, shape index: {}]
  %s2 = inlined_call_operand.hbm [shape: f32[2,4,4], index: 2, kind: output, shape index: {}]
  %s3 = sld [smem:[#allocation0]]
  $region53: #{tpu_custom_call.1} parent=0
    _
  %s5 = ssub.s32 1, %s3
  %s6 = scalar_select 0, %s5, %s3
  $region1: #{tpu_custom_call.1} parent=0
    #allocation3 [shape = 'u8[65536]{0}', space=vmem, size = 0x10000, scoped, tag = 'input window, operand 0']
    #allocation4 [shape = 's32[2]{0}', space=sflag, size = 0x8, scoped, tag = 'scoped memory for tpu_custom_call.1']
    #allocation5 [shape = 's32[2]{0}', space=sflag, size = 0x8, scoped, tag = 'scoped memory for tpu_custom_call.1']
    #allocation6 [shape = 'u8[4096]{0}', space=vmem, size = 0x1000, scoped, tag = 'input window, operand 1']
    #allocation7 [shape = 's32[2]{0}', space=sflag, size = 0x8, scoped, tag = 'scoped memory for tpu_custom_call.1']
    #allocation8 [shape = 'u8[4096]{0}', space=vmem, size = 0x1000, scoped, tag = 'output window, operand 0']
    %7 = vsyncpa [#allocation4], 0
    %s8 = scalar_lea.sflag [#allocation4], 1
    %9 = vsyncpa %s8, 0
    %10 = vsyncpa [#allocation7], 0
    %s11 = scalar_lea.sflag [#allocation7], 1
    %12 = vsyncpa %s11, 0
    %13 = vsyncpa [#allocation5], 0
    %s14 = scalar_lea.sflag [#allocation5], 1
    %15 = vsyncpa %s14, 0
    loop: start=0, step=1, limit=4
    $region2: #{tpu_custom_call.1} parent=1 // loop_pre_header
      _
    $region3: #{tpu_custom_call.1} parent=1 // loop_header
      %s17 = sphi 0, %s21
      %p18 = scmp.ge.s32.totalorder %s17, 4
      %s24 = sphi 0, %s36
      %s25 = sphi 0, %s32
      %s26 = sphi 0, %s24
      %s27 = sphi 0, %s25
      %s28 = sphi 0, %s26
      %s29 = sphi 0, %s27
      %s41 = sphi 0, %s43
      %s44 = sphi 0, %s41
      %s45 = sphi 0, %s44
      %s61 = sphi 0, %s45
      %s69 = sphi 0, %s71
      %s72 = sphi 0, %s69
      %s73 = sphi 0, %s72
      %s89 = sphi 0, %s73
      %s95 = sphi 0, %s97
      %s98 = sphi 0, %s95
      %s99 = sphi 0, %s98
      %s115 = sphi 0, %s99
    $region4: #{tpu_custom_call.1} parent=1 // loop_header_branch
      %20 = sbr.rel (%p18) target = $region8
    $region5: #{tpu_custom_call.1} parent=1 // loop_body
      %s22 = ssub.s32 %s17, 1
      %s23 = ssub.s32 %s17, 2
      %s30 = sadd.s32 1, %s25
      %p31 = scmp.ge.s32.totalorder %s30, 1
      %s32 = scalar_select %p31, 0, %s30
      %s33 = sadd.s32 1, %s24
      %s34 = scalar_select %p31, %s33, %s24
      %p35 = scmp.ge.s32.totalorder %s34, 2
      %s36 = scalar_select %p35, 0, %s34
      %s37 = ssub.s32 %s24, %s36
      %s38 = ssub.s32 %s25, %s32
      %s39 = sor.u32 %s37, %s38
      %p40 = scmp.eq.s32.totalorder %s39, 0
      %s42 = sadd.s32 %s41, 1
      %s43 = scalar_select %p40, %s41, %s42
      %p46 = pneg %p40
      %p47 = scmp.eq.s32.totalorder %s17, 1
      %p48 = por %p46, %p47
      %p49 = scmp.ne.s32.totalorder %s41, %s44
      %p50 = scmp.eq.s32.totalorder %s17, 0
      %p51 = por %p49, %p50
      %p52 = scmp.ne.s32.totalorder %s41, %s44
      %p53 = scmp.eq.s32.totalorder %s22, 1
      %p54 = por %p52, %p53
      %p55 = scmp.ne.s32.totalorder %s44, %s45
      %p56 = scmp.eq.s32.totalorder %s22, 0
      %p57 = por %p55, %p56
      %p58 = scmp.ne.s32.totalorder %s44, %s45
      %p59 = scmp.eq.s32.totalorder %s23, 1
      %p60 = por %p58, %p59
      %p62 = scmp.ne.s32.totalorder %s45, %s61
      %p63 = scmp.eq.s32.totalorder %s23, 0
      %p64 = por %p62, %p63
      %s65 = ssub.s32 %s24, %s36
      %s66 = ssub.s32 %s25, %s32
      %s67 = sor.u32 %s65, %s66
      %p68 = scmp.eq.s32.totalorder %s67, 0
      %s70 = sadd.s32 %s69, 1
      %s71 = scalar_select %p68, %s69, %s70
      %p74 = pneg %p68
      %p75 = scmp.eq.s32.totalorder %s17, 1
      %p76 = por %p74, %p75
      %p77 = scmp.ne.s32.totalorder %s69, %s72
      %p78 = scmp.eq.s32.totalorder %s17, 0
      %p79 = por %p77, %p78
      %p80 = scmp.ne.s32.totalorder %s69, %s72
      %p81 = scmp.eq.s32.totalorder %s22, 1
      %p82 = por %p80, %p81
      %p83 = scmp.ne.s32.totalorder %s72, %s73
      %p84 = scmp.eq.s32.totalorder %s22, 0
      %p85 = por %p83, %p84
      %p86 = scmp.ne.s32.totalorder %s72, %s73
      %p87 = scmp.eq.s32.totalorder %s23, 1
      %p88 = por %p86, %p87
      %p90 = scmp.ne.s32.totalorder %s73, %s89
      %p91 = scmp.eq.s32.totalorder %s23, 0
      %p92 = por %p90, %p91
      %s93 = ssub.s32 %s24, %s36
      %p94 = scmp.eq.s32.totalorder %s93, 0
      %s96 = sadd.s32 %s95, 1
      %s97 = scalar_select %p94, %s95, %s96
      %p100 = pneg %p94
      %p101 = scmp.eq.s32.totalorder %s17, 1
      %p102 = por %p100, %p101
      %p103 = scmp.ne.s32.totalorder %s95, %s98
      %p104 = scmp.eq.s32.totalorder %s17, 0
      %p105 = por %p103, %p104
      %p106 = scmp.ne.s32.totalorder %s95, %s98
      %p107 = scmp.eq.s32.totalorder %s22, 1
      %p108 = por %p106, %p107
      %p109 = scmp.ne.s32.totalorder %s98, %s99
      %p110 = scmp.eq.s32.totalorder %s22, 0
      %p111 = por %p109, %p110
      %p112 = scmp.ne.s32.totalorder %s98, %s99
      %p113 = scmp.eq.s32.totalorder %s23, 1
      %p114 = por %p112, %p113
      %p116 = scmp.ne.s32.totalorder %s99, %s115
      %p117 = scmp.eq.s32.totalorder %s23, 0
      %p118 = por %p116, %p117
      %p119 = scmp.le.s32.totalorder 1, %s17
      %p120 = scmp.lt.s32.totalorder %s17, 3
      %p121 = pnand %p119, %p120
      %p122 = pneg %p121
      // Predicated region
      $region9: #{tpu_custom_call.1} parent=5 // pred_check
        _
      $region10: #{tpu_custom_call.1} parent=5 // pred_check_branch
        %124 = sbr.rel (%p121) target = $region12
      $region11: #{tpu_custom_call.1} parent=5 // pred_region
        %s125 = ssub.s32 %s17, 1
      $region12: #{tpu_custom_call.1} parent=5 // pred_fallthru
        _
      %p126 = scmp.lt.s32.totalorder %s17, 2
      // Predicated region
      $region13: #{tpu_custom_call.1} parent=5 // pred_check
        %p127 = pneg %p126
      $region14: #{tpu_custom_call.1} parent=5 // pred_check_branch
        %129 = sbr.rel (%p127) target = $region16
      $region15: #{tpu_custom_call.1} parent=5 // pred_region
        // Predicated region
        $region17: #{tpu_custom_call.1} parent=15 // pred_check
          %p130 = pneg %p51
        $region18: #{tpu_custom_call.1} parent=15 // pred_check_branch
          %132 = sbr.rel (%p130) target = $region20
        $region19: #{tpu_custom_call.1} parent=15 // pred_region
          %s133 = sand.u32 %s41, 1
          %s134 = scalar_lea.sflag [#allocation4], %s133
          %s135 = sand.u32 %s41, 1
          %s136 = smul.addr %s135, 64
          %s137 = scalar_lea.vmem [#allocation3], %s136
          %s138 = smul.u32 2, %s25
          %s140 = ssub.s32 1024, 1024
          %141 = vsyncadd %s134, %s140
          %s142 = smul.addr %s24, 8
          %s143 = sadd.s32 %s138, %s142
          %s144 = smul.addr %s143, 128
          %s145 = scalar_lea.hbm %s0, %s144
          %s146 = sshll.u32 %s137, 4
          %s147 = int_to_ptr.vmem [resolvable:$true] %s146
          %152 = dma.hbm_to_vmem [thread:$0]  %s145, 1024, %s147, %s134, 128, 128, 8
        $region20: #{tpu_custom_call.1} parent=15 // pred_fallthru
          _
        // Predicated region
        $region21: #{tpu_custom_call.1} parent=15 // pred_check
          %p153 = pneg %p79
        $region22: #{tpu_custom_call.1} parent=15 // pred_check_branch
          %155 = sbr.rel (%p153) target = $region24
        $region23: #{tpu_custom_call.1} parent=15 // pred_region
          %s156 = sand.u32 %s69, 1
          %s157 = scalar_lea.sflag [#allocation7], %s156
          %s158 = sand.u32 %s69, 1
          %s159 = smul.addr %s158, 4
          %s160 = scalar_lea.vmem [#allocation6], %s159
          %s161 = smul.u32 2, %s25
          %s163 = ssub.s32 64, 64
          %164 = vsyncadd %s157, %s163
          %s165 = smul.addr %s24, 2
          %s166 = sadd.s32 %s161, %s165
          %s167 = smul.addr %s166, 32
          %s168 = scalar_lea.hbm %s1, %s167
          %s169 = sshll.u32 %s160, 4
          %s170 = int_to_ptr.vmem [resolvable:$true] %s169
          %175 = dma.hbm_to_vmem [thread:$0]  %s168, 64, %s170, %s157, 32, 32, 2
        $region24: #{tpu_custom_call.1} parent=15 // pred_fallthru
          _
      $region16: #{tpu_custom_call.1} parent=5 // pred_fallthru
        _
      %p176 = scmp.le.s32.totalorder 1, %s17
      %p177 = scmp.lt.s32.totalorder %s17, 3
      %p178 = pnand %p176, %p177
      %p179 = pneg %p178
      // Predicated region
      $region25: #{tpu_custom_call.1} parent=5 // pred_check
        _
      $region26: #{tpu_custom_call.1} parent=5 // pred_check_branch
        %181 = sbr.rel (%p178) target = $region28
      $region27: #{tpu_custom_call.1} parent=5 // pred_region
        %s182 = ssub.s32 %s17, 1
        %s183 = sand.u32 %s44, 1
        %s184 = scalar_lea.sflag [#allocation4], %s183
        %s185 = sand.u32 %s44, 1
        %s186 = smul.addr %s185, 64
        %s187 = scalar_lea.vmem [#allocation3], %s186
        // Predicated region
        $region29: #{tpu_custom_call.1} parent=27 // pred_check
          %p188 = pneg %p57
        $region30: #{tpu_custom_call.1} parent=27 // pred_check_branch
          %190 = sbr.rel (%p188) target = $region32
        $region31: #{tpu_custom_call.1} parent=27 // pred_region
          %191 = dma.done %s184, 1024
        $region32: #{tpu_custom_call.1} parent=27 // pred_fallthru
          _
        %s192 = sand.u32 %s72, 1
        %s193 = scalar_lea.sflag [#allocation7], %s192
        %s194 = sand.u32 %s72, 1
        %s195 = smul.addr %s194, 4
        %s196 = scalar_lea.vmem [#allocation6], %s195
        // Predicated region
        $region33: #{tpu_custom_call.1} parent=27 // pred_check
          %p197 = pneg %p85
        $region34: #{tpu_custom_call.1} parent=27 // pred_check_branch
          %199 = sbr.rel (%p197) target = $region36
        $region35: #{tpu_custom_call.1} parent=27 // pred_region
          %200 = dma.done %s193, 64
        $region36: #{tpu_custom_call.1} parent=27 // pred_fallthru
          _
        %s201 = sand.u32 %s44, 1
        %s202 = scalar_lea.sflag [#allocation4], %s201
        %s203 = sand.u32 %s44, 1
        %s204 = smul.addr %s203, 64
        %s205 = scalar_lea.vmem [#allocation3], %s204
        %p206 = pneg %p57
        %p207 = pneg %p54
        %s208 = sand.u32 %s72, 1
        %s209 = scalar_lea.sflag [#allocation7], %s208
        %s210 = sand.u32 %s72, 1
        %s211 = smul.addr %s210, 4
        %s212 = scalar_lea.vmem [#allocation6], %s211
        %p213 = pneg %p85
        %p214 = pneg %p82
        %p215 = pneg %p111
        %p216 = pneg %p108
        %s217 = sand.u32 %s98, 1
        %s218 = scalar_lea.sflag [#allocation5], %s217
        %s219 = sand.u32 %s98, 1
        %s220 = smul.addr %s219, 4
        %s221 = scalar_lea.vmem [#allocation8], %s220
        %s222 = smul.u32 2, %s27
        %s223 = smul.u32 2, %s27
        %p224 = scmp.eq.s32.totalorder %s27, 0
        // Predicated region
        $region37: #{tpu_custom_call.1} parent=27 // pred_check
          %p225 = pneg %p224
        $region38: #{tpu_custom_call.1} parent=27 // pred_check_branch
          %227 = sbr.rel (%p225) target = $region40
        $region39: #{tpu_custom_call.1} parent=27 // pred_region
          %vm228 = vcmask 27648
          %229 = vst.msk [vmem:[%s221] sm:$0xf] %vm228, 0.0
        $region40: #{tpu_custom_call.1} parent=27 // pred_fallthru
          _
        %v230 = vld [vmem:[%s196] sm:$0x3]
        %v231 = vld [vmem:[%s196 + $0x2] sm:$0x3]
        %v232 = vunpack.c.0.s8 %v230
        %v233 = vunpack.c.0.s8 %v231
        %v234 = vld [vmem:[%s187] sm:$0xff]
        %v235 = vld [vmem:[%s187 + $0x8] sm:$0xff]
        %s236 = scalar_lea.vmem %s187, 16 [#allocation3]
        %v237 = vld [vmem:[%s236] sm:$0xff]
        %v238 = vld [vmem:[%s236 + $0x8] sm:$0xff]
        %v239 = vmax.f32 %v234, %v237
        %v240 = vmax.f32 %v235, %v238
        %s241 = scalar_lea.vmem %s187, 32 [#allocation3]
        %v242 = vld [vmem:[%s241] sm:$0xff]
        %v243 = vld [vmem:[%s241 + $0x8] sm:$0xff]
        %v244 = vmax.f32 %v239, %v242
        %v245 = vmax.f32 %v240, %v243
        %s246 = scalar_lea.vmem %s187, 48 [#allocation3]
        %v247 = vld [vmem:[%s246] sm:$0xff]
        %v248 = vld [vmem:[%s246 + $0x8] sm:$0xff]
        %v249 = vmax.f32 %v244, %v247
        %v250 = vmax.f32 %v245, %v248
        %v251 = vsub.f32 %v234, %v249
        %v252 = vsub.f32 %v235, %v250
        %v253 = vmul.f32 %v251, 1.442695
        %v254 = vpow.pop %v253
        %v255 = vmul.f32 %v252, 1.442695
        %v256 = vpow.pop %v255
        %vm257 = vcmask 130048
        %258 = vst.msk [vmem:[#allocation2] sm:$0xff] %vm257, %v254
        %259 = vst.msk [vmem:[#allocation2 + $0x8] sm:$0xff] %vm257, %v256
        %vm260 = vcmp.eq.s32.totalorder %v232, 0
        %vm261 = vcmp.eq.s32.totalorder %v233, 0
        %v262 = vsel %vm260, %v251, 0.0
        %v263 = vsel %vm261, %v252, 0.0
        %v264 = vadd.f32 %v262, 0.0
        %v265 = vadd.f32 %v263, 0.0
        %v266 = vsel %vm260, 1.0, 0.0
        %v267 = vsel %vm261, 1.0, 0.0
        %v268 = vsel %vm257, %v266, 0.0
        %269 = vadd.xlane.f32.xlu0 %v268
        %v270 = vpop.xlane.xlu0 %269
        %v271 = vsel %vm257, %v267, 0.0
        %272 = vadd.xlane.f32.xlu0 %v271
        %v273 = vpop.xlane.xlu0 %272
        %v274 = vadd.f32 %v270, %v273
        %v275 = vrot.slane %v274, 4
        %v276 = vadd.f32 %v274, %v275
        %v277 = vrot.slane %v276, 2
        %v278 = vadd.f32 %v276, %v277
        %v279 = vrot.slane %v278, 1
        %v280 = vadd.f32 %v278, %v279
        %v281 = vld [vmem:[%s221] sm:$0x1]
        %v282 = vadd.f32 %v281, %v280
        %vm283 = vcmask 16400
        %284 = vst.msk [vmem:[%s221] sm:$0x1] %vm283, %v282
        %v285 = vld [vmem:[%s236] sm:$0xff]
        %v286 = vld [vmem:[%s236 + $0x8] sm:$0xff]
        %v287 = vsub.f32 %v285, %v249
        %v288 = vsub.f32 %v286, %v250
        %v289 = vmul.f32 %v287, 1.442695
        %v290 = vpow.pop %v289
        %v291 = vmul.f32 %v288, 1.442695
        %v292 = vpow.pop %v291
        %s293 = scalar_lea.vmem [#allocation2], 16
        %294 = vst.msk [vmem:[%s293] sm:$0xff] %vm257, %v290
        %295 = vst.msk [vmem:[%s293 + $0x8] sm:$0xff] %vm257, %v292
        %v296 = vadd.f32 %v254, %v290
        %v297 = vadd.f32 %v256, %v292
        %vm298 = vcmp.eq.s32.totalorder %v232, 1
        %vm299 = vcmp.eq.s32.totalorder %v233, 1
        %v300 = vsel %vm298, %v287, 0.0
        %v301 = vsel %vm299, %v288, 0.0
        %v302 = vadd.f32 %v264, %v300
        %v303 = vadd.f32 %v265, %v301
        %v304 = vsel %vm298, 1.0, 0.0
        %v305 = vsel %vm299, 1.0, 0.0
        %v306 = vsel %vm257, %v304, 0.0
        %307 = vadd.xlane.f32.xlu0 %v306
        %v308 = vpop.xlane.xlu0 %307
        %v309 = vsel %vm257, %v305, 0.0
        %310 = vadd.xlane.f32.xlu0 %v309
        %v311 = vpop.xlane.xlu0 %310
        %v312 = vadd.f32 %v308, %v311
        %v313 = vrot.slane %v312, 4
        %v314 = vadd.f32 %v312, %v313
        %v315 = vrot.slane %v314, 2
        %v316 = vadd.f32 %v314, %v315
        %v317 = vrot.slane %v316, 1
        %v318 = vadd.f32 %v316, %v317
        %v319 = vld [vmem:[%s221 + $0x1] sm:$0x1]
        %v320 = vadd.f32 %v319, %v318
        %321 = vst.msk [vmem:[%s221 + $0x1] sm:$0x1] %vm283, %v320
        %v322 = vld [vmem:[%s241] sm:$0xff]
        %v323 = vld [vmem:[%s241 + $0x8] sm:$0xff]
        %v324 = vsub.f32 %v322, %v249
        %v325 = vsub.f32 %v323, %v250
        %v326 = vmul.f32 %v324, 1.442695
        %v327 = vpow.pop %v326
        %v328 = vmul.f32 %v325, 1.442695
        %v329 = vpow.pop %v328
        %s330 = scalar_lea.vmem [#allocation2], 32
        %331 = vst.msk [vmem:[%s330] sm:$0xff] %vm257, %v327
        %332 = vst.msk [vmem:[%s330 + $0x8] sm:$0xff] %vm257, %v329
        %v333 = vadd.f32 %v296, %v327
        %v334 = vadd.f32 %v297, %v329
        %vm335 = vcmp.eq.s32.totalorder %v232, 2
        %vm336 = vcmp.eq.s32.totalorder %v233, 2
        %v337 = vsel %vm335, %v324, 0.0
        %v338 = vsel %vm336, %v325, 0.0
        %v339 = vadd.f32 %v302, %v337
        %v340 = vadd.f32 %v303, %v338
        %v341 = vsel %vm335, 1.0, 0.0
        %v342 = vsel %vm336, 1.0, 0.0
        %v343 = vsel %vm257, %v341, 0.0
        %344 = vadd.xlane.f32.xlu0 %v343
        %v345 = vpop.xlane.xlu0 %344
        %v346 = vsel %vm257, %v342, 0.0
        %347 = vadd.xlane.f32.xlu0 %v346
        %v348 = vpop.xlane.xlu0 %347
        %v349 = vadd.f32 %v345, %v348
        %v350 = vrot.slane %v349, 4
        %v351 = vadd.f32 %v349, %v350
        %v352 = vrot.slane %v351, 2
        %v353 = vadd.f32 %v351, %v352
        %v354 = vrot.slane %v353, 1
        %v355 = vadd.f32 %v353, %v354
        %v356 = vld [vmem:[%s221 + $0x2] sm:$0x1]
        %v357 = vadd.f32 %v356, %v355
        %358 = vst.msk [vmem:[%s221 + $0x2] sm:$0x1] %vm283, %v357
        %v359 = vld [vmem:[%s246] sm:$0xff]
        %v360 = vld [vmem:[%s246 + $0x8] sm:$0xff]
        %v361 = vsub.f32 %v359, %v249
        %v362 = vsub.f32 %v360, %v250
        %v363 = vmul.f32 %v361, 1.442695
        %v364 = vpow.pop %v363
        %v365 = vmul.f32 %v362, 1.442695
        %v366 = vpow.pop %v365
        %s367 = scalar_lea.vmem [#allocation2], 48
        %368 = vst.msk [vmem:[%s367] sm:$0xff] %vm257, %v364
        %369 = vst.msk [vmem:[%s367 + $0x8] sm:$0xff] %vm257, %v366
        %v370 = vadd.f32 %v333, %v364
        %v371 = vadd.f32 %v334, %v366
        %vm372 = vcmp.eq.s32.totalorder %v232, 3
        %vm373 = vcmp.eq.s32.totalorder %v233, 3
        %v374 = vsel %vm372, %v361, 0.0
        %v375 = vsel %vm373, %v362, 0.0
        %v376 = vadd.f32 %v339, %v374
        %v377 = vadd.f32 %v340, %v375
        %v378 = vsel %vm372, 1.0, 0.0
        %v379 = vsel %vm373, 1.0, 0.0
        %v380 = vsel %vm257, %v378, 0.0
        %381 = vadd.xlane.f32.xlu0 %v380
        %v382 = vpop.xlane.xlu0 %381
        %v383 = vsel %vm257, %v379, 0.0
        %384 = vadd.xlane.f32.xlu0 %v383
        %v385 = vpop.xlane.xlu0 %384
        %v386 = vadd.f32 %v382, %v385
        %v387 = vrot.slane %v386, 4
        %v388 = vadd.f32 %v386, %v387
        %v389 = vrot.slane %v388, 2
        %v390 = vadd.f32 %v388, %v389
        %v391 = vrot.slane %v390, 1
        %v392 = vadd.f32 %v390, %v391
        %v393 = vld [vmem:[%s221 + $0x3] sm:$0x1]
        %v394 = vadd.f32 %v393, %v392
        %395 = vst.msk [vmem:[%s221 + $0x3] sm:$0x1] %vm283, %v394
        %v396 = vrcp.pop %v370
        %v397 = vrcp.pop %v371
        %v398 = vlog2.pop %v370
        %v399 = vmul.f32 %v398, 0.6931472
        %v400 = vlog2.pop %v371
        %v401 = vmul.f32 %v400, 0.6931472
        %vm402 = vcmp.ge.s32.totalorder %v232, 0
        %vm403 = vcmp.ge.s32.totalorder %v233, 0
        %vm404 = vcmp.lt.s32.totalorder %v232, 4
        %vm405 = vcmp.lt.s32.totalorder %v233, 4
        %vm406 = vmand %vm402, %vm404
        %vm407 = vmand %vm403, %vm405
        %v408 = vsub.f32 %v399, %v376
        %v409 = vsub.f32 %v401, %v377
        %v410 = vsel %vm406, %v408, 0.0
        %v411 = vsel %vm407, %v409, 0.0
        %v412 = vsel %vm257, %v410, 0.0
        %413 = vadd.xlane.f32.xlu0 %v412
        %v414 = vpop.xlane.xlu0 %413
        %v415 = vsel %vm257, %v411, 0.0
        %416 = vadd.xlane.f32.xlu0 %v415
        %v417 = vpop.xlane.xlu0 %416
        %v418 = vadd.f32 %v414, %v417
        %v419 = vrot.slane %v418, 4
        %v420 = vadd.f32 %v418, %v419
        %v421 = vrot.slane %v420, 2
        %v422 = vadd.f32 %v420, %v421
        %v423 = vrot.slane %v422, 1
        %v424 = vadd.f32 %v422, %v423
        %v425 = vld [vmem:[%s221] sm:$0x1]
        %v426 = vadd.f32 %v425, %v424
        %vm427 = vcmask 24600
        %428 = vst.msk [vmem:[%s221] sm:$0x1] %vm427, %v426
        %v429 = vld [vmem:[#allocation2] sm:$0xff]
        %v430 = vld [vmem:[#allocation2 + $0x8] sm:$0xff]
        %v431 = vmul.f32 %v429, %v396
        %v432 = vmul.f32 %v430, %v397
        %v433 = vsel %vm260, %v431, 0.0
        %v434 = vsel %vm261, %v432, 0.0
        %v435 = vsel %vm257, %v433, 0.0
        %436 = vadd.xlane.f32.xlu0 %v435
        %v437 = vpop.xlane.xlu0 %436
        %v438 = vsel %vm257, %v434, 0.0
        %439 = vadd.xlane.f32.xlu0 %v438
        %v440 = vpop.xlane.xlu0 %439
        %v441 = vadd.f32 %v437, %v440
        %v442 = vrot.slane %v441, 4
        %v443 = vadd.f32 %v441, %v442
        %v444 = vrot.slane %v443, 2
        %v445 = vadd.f32 %v443, %v444
        %v446 = vrot.slane %v445, 1
        %v447 = vadd.f32 %v445, %v446
        %v448 = vsel %vm257, %v431, 0.0
        %449 = vadd.xlane.f32.xlu0 %v448
        %v450 = vpop.xlane.xlu0 %449
        %v451 = vsel %vm257, %v432, 0.0
        %452 = vadd.xlane.f32.xlu0 %v451
        %v453 = vpop.xlane.xlu0 %452
        %v454 = vadd.f32 %v450, %v453
        %v455 = vrot.slane %v454, 4
        %v456 = vadd.f32 %v454, %v455
        %v457 = vrot.slane %v456, 2
        %v458 = vadd.f32 %v456, %v457
        %v459 = vrot.slane %v458, 1
        %v460 = vadd.f32 %v458, %v459
        %v461 = vld [vmem:[%s221] sm:$0x1]
        %v462 = vadd.f32 %v461, %v447
        %vm463 = vcmask 0
        %464 = vst.msk [vmem:[%s221] sm:$0x1] %vm463, %v462
        %v465 = vld [vmem:[%s221] sm:$0x1]
        %v466 = vadd.f32 %v465, %v460
        %vm467 = vcmask 8200
        %468 = vst.msk [vmem:[%s221] sm:$0x1] %vm467, %v466
        %v469 = vld [vmem:[%s293] sm:$0xff]
        %v470 = vld [vmem:[%s293 + $0x8] sm:$0xff]
        %v471 = vmul.f32 %v469, %v396
        %v472 = vmul.f32 %v470, %v397
        %v473 = vsel %vm298, %v471, 0.0
        %v474 = vsel %vm299, %v472, 0.0
        %v475 = vsel %vm257, %v473, 0.0
        %476 = vadd.xlane.f32.xlu0 %v475
        %v477 = vpop.xlane.xlu0 %476
        %v478 = vsel %vm257, %v474, 0.0
        %479 = vadd.xlane.f32.xlu0 %v478
        %v480 = vpop.xlane.xlu0 %479
        %v481 = vadd.f32 %v477, %v480
        %v482 = vrot.slane %v481, 4
        %v483 = vadd.f32 %v481, %v482
        %v484 = vrot.slane %v483, 2
        %v485 = vadd.f32 %v483, %v484
        %v486 = vrot.slane %v485, 1
        %v487 = vadd.f32 %v485, %v486
        %v488 = vsel %vm257, %v471, 0.0
        %489 = vadd.xlane.f32.xlu0 %v488
        %v490 = vpop.xlane.xlu0 %489
        %v491 = vsel %vm257, %v472, 0.0
        %492 = vadd.xlane.f32.xlu0 %v491
        %v493 = vpop.xlane.xlu0 %492
        %v494 = vadd.f32 %v490, %v493
        %v495 = vrot.slane %v494, 4
        %v496 = vadd.f32 %v494, %v495
        %v497 = vrot.slane %v496, 2
        %v498 = vadd.f32 %v496, %v497
        %v499 = vrot.slane %v498, 1
        %v500 = vadd.f32 %v498, %v499
        %v501 = vld [vmem:[%s221 + $0x1] sm:$0x1]
        %v502 = vadd.f32 %v501, %v487
        %503 = vst.msk [vmem:[%s221 + $0x1] sm:$0x1] %vm463, %v502
        %v504 = vld [vmem:[%s221 + $0x1] sm:$0x1]
        %v505 = vadd.f32 %v504, %v500
        %506 = vst.msk [vmem:[%s221 + $0x1] sm:$0x1] %vm467, %v505
        %v507 = vld [vmem:[%s330] sm:$0xff]
        %v508 = vld [vmem:[%s330 + $0x8] sm:$0xff]
        %v509 = vmul.f32 %v507, %v396
        %v510 = vmul.f32 %v508, %v397
        %v511 = vsel %vm335, %v509, 0.0
        %v512 = vsel %vm336, %v510, 0.0
        %v513 = vsel %vm257, %v511, 0.0
        %514 = vadd.xlane.f32.xlu0 %v513
        %v515 = vpop.xlane.xlu0 %514
        %v516 = vsel %vm257, %v512, 0.0
        %517 = vadd.xlane.f32.xlu0 %v516
        %v518 = vpop.xlane.xlu0 %517
        %v519 = vadd.f32 %v515, %v518
        %v520 = vrot.slane %v519, 4
        %v521 = vadd.f32 %v519, %v520
        %v522 = vrot.slane %v521, 2
        %v523 = vadd.f32 %v521, %v522
        %v524 = vrot.slane %v523, 1
        %v525 = vadd.f32 %v523, %v524
        %v526 = vsel %vm257, %v509, 0.0
        %527 = vadd.xlane.f32.xlu0 %v526
        %v528 = vpop.xlane.xlu0 %527
        %v529 = vsel %vm257, %v510, 0.0
        %530 = vadd.xlane.f32.xlu0 %v529
        %v531 = vpop.xlane.xlu0 %530
        %v532 = vadd.f32 %v528, %v531
        %v533 = vrot.slane %v532, 4
        %v534 = vadd.f32 %v532, %v533
        %v535 = vrot.slane %v534, 2
        %v536 = vadd.f32 %v534, %v535
        %v537 = vrot.slane %v536, 1
        %v538 = vadd.f32 %v536, %v537
        %v539 = vld [vmem:[%s221 + $0x2] sm:$0x1]
        %v540 = vadd.f32 %v539, %v525
        %541 = vst.msk [vmem:[%s221 + $0x2] sm:$0x1] %vm463, %v540
        %v542 = vld [vmem:[%s221 + $0x2] sm:$0x1]
        %v543 = vadd.f32 %v542, %v538
        %544 = vst.msk [vmem:[%s221 + $0x2] sm:$0x1] %vm467, %v543
        %v545 = vld [vmem:[%s367] sm:$0xff]
        %v546 = vld [vmem:[%s367 + $0x8] sm:$0xff]
        %v547 = vmul.f32 %v545, %v396
        %v548 = vmul.f32 %v546, %v397
        %v549 = vsel %vm372, %v547, 0.0
        %v550 = vsel %vm373, %v548, 0.0
        %v551 = vsel %vm257, %v549, 0.0
        %552 = vadd.xlane.f32.xlu0 %v551
        %v553 = vpop.xlane.xlu0 %552
        %v554 = vsel %vm257, %v550, 0.0
        %555 = vadd.xlane.f32.xlu0 %v554
        %v556 = vpop.xlane.xlu0 %555
        %v557 = vadd.f32 %v553, %v556
        %v558 = vrot.slane %v557, 4
        %v559 = vadd.f32 %v557, %v558
        %v560 = vrot.slane %v559, 2
        %v561 = vadd.f32 %v559, %v560
        %v562 = vrot.slane %v561, 1
        %v563 = vadd.f32 %v561, %v562
        %v564 = vsel %vm257, %v547, 0.0
        %565 = vadd.xlane.f32.xlu0 %v564
        %v566 = vpop.xlane.xlu0 %565
        %v567 = vsel %vm257, %v548, 0.0
        %568 = vadd.xlane.f32.xlu0 %v567
        %v569 = vpop.xlane.xlu0 %568
        %v570 = vadd.f32 %v566, %v569
        %v571 = vrot.slane %v570, 4
        %v572 = vadd.f32 %v570, %v571
        %v573 = vrot.slane %v572, 2
        %v574 = vadd.f32 %v572, %v573
        %v575 = vrot.slane %v574, 1
        %v576 = vadd.f32 %v574, %v575
        %v577 = vld [vmem:[%s221 + $0x3] sm:$0x1]
        %v578 = vadd.f32 %v577, %v563
        %579 = vst.msk [vmem:[%s221 + $0x3] sm:$0x1] %vm463, %v578
        %v580 = vld [vmem:[%s221 + $0x3] sm:$0x1]
        %v581 = vadd.f32 %v580, %v576
        %582 = vst.msk [vmem:[%s221 + $0x3] sm:$0x1] %vm467, %v581
        %s583 = sand.u32 %s98, 1
        %s584 = scalar_lea.sflag [#allocation5], %s583
        %s585 = sand.u32 %s98, 1
        %s586 = smul.addr %s585, 4
        %s587 = scalar_lea.vmem [#allocation8], %s586
        // Predicated region
        $region41: #{tpu_custom_call.1} parent=27 // pred_check
          %p588 = pneg %p108
        $region42: #{tpu_custom_call.1} parent=27 // pred_check_branch
          %590 = sbr.rel (%p588) target = $region44
        $region43: #{tpu_custom_call.1} parent=27 // pred_region
          %s592 = ssub.s32 64, 64
          %593 = vsyncadd %s584, %s592
          %s594 = smul.addr %s26, 64
          %s595 = scalar_lea.hbm %s2, %s594
          %s597 = sshll.u32 %s587, 4
          %s598 = int_to_ptr.vmem [resolvable:$true] %s597
          %600 = dma.vmem_to_hbm [thread:$0]  %s598, 64, %s595, %s584
        $region44: #{tpu_custom_call.1} parent=27 // pred_fallthru
          _
      $region28: #{tpu_custom_call.1} parent=5 // pred_fallthru
        _
      %p601 = scmp.le.s32.totalorder 2, %s17
      // Predicated region
      $region45: #{tpu_custom_call.1} parent=5 // pred_check
        %p602 = pneg %p601
      $region46: #{tpu_custom_call.1} parent=5 // pred_check_branch
        %604 = sbr.rel (%p602) target = $region48
      $region47: #{tpu_custom_call.1} parent=5 // pred_region
        %s605 = ssub.s32 %s17, 2
        // Predicated region
        $region49: #{tpu_custom_call.1} parent=47 // pred_check
          %p606 = pneg %p114
        $region50: #{tpu_custom_call.1} parent=47 // pred_check_branch
          %608 = sbr.rel (%p606) target = $region52
        $region51: #{tpu_custom_call.1} parent=47 // pred_region
          %s609 = sand.u32 %s99, 1
          %s610 = scalar_lea.sflag [#allocation5], %s609
          %s611 = sand.u32 %s99, 1
          %s612 = smul.addr %s611, 4
          %s613 = scalar_lea.vmem [#allocation8], %s612
          %614 = dma.done %s610, 64
        $region52: #{tpu_custom_call.1} parent=47 // pred_fallthru
          _
      $region48: #{tpu_custom_call.1} parent=5 // pred_fallthru
        _
    $region6: #{tpu_custom_call.1} parent=1 // loop_footer
      %s21 = sadd.s32 1, %s17
    $region7: #{tpu_custom_call.1} parent=1 // loop_footer_branch
      %16 = sbr.rel target = $region3
    $region8: #{tpu_custom_call.1} parent=1 // loop_exit
      _
    %615 = vsyncpa [#allocation4], 1
    %s616 = scalar_lea.sflag [#allocation4], 1
    %617 = vsyncpa %s616, 1
    %618 = vsyncpa [#allocation7], 1
    %s619 = scalar_lea.sflag [#allocation7], 1
    %620 = vsyncpa %s619, 1
    %621 = vsyncpa [#allocation5], 1
    %s622 = scalar_lea.sflag [#allocation5], 1
    %623 = vsyncpa %s622, 1

</llo_original>
